<compile_context>
chip_gen: v6e
topology: v6e:2x2x1
jax: 0.10.0
libtpu: 0.0.40
codegen_flags: <defaults>
</compile_context>

<pallas_src>
import jax
import jax.numpy as jnp
from jax import lax
from jax.experimental import pallas as pl
from jax.experimental.pallas import tpu as pltpu


def lstm_fc_kernel(x_ref, wih_ref, whh_ref, b_ref, fcw_ref, fcb_ref,
                   out_ref, xg_ref):
    T, Bp, D = x_ref.shape
    H4 = whh_ref.shape[1]
    H = H4 // 4

    # ---- Phase 1: hoisted input projection for every timestep (one bf16
    #      MXU matmul, f32 accumulation into the VMEM scratch).
    x_all = x_ref[...].reshape(T * Bp, D)                       # (T*Bp, D) bf16
    xg_ref[...] = (jnp.dot(x_all, wih_ref[...],
                           preferred_element_type=jnp.float32)
                   + b_ref[...])                                # (T*Bp, 4H) f32

    # ---- Phase 2: sequential recurrence (only h @ W_hh on the critical path).
    whh = whh_ref[...]                                          # bf16, hoisted
    lane = lax.broadcasted_iota(jnp.int32, (Bp, H4), 1)         # hoisted mask
    g_mask = (lane >= 2 * H) & (lane < 3 * H)                   # tanh lanes (g)

    def step(t, carry):
        h, c = carry                                            # f32 carries
        row0 = pl.multiple_of(t * Bp, Bp)                       # aligned slab
        gates = xg_ref[pl.ds(row0, Bp), :] + jnp.dot(
            h.astype(jnp.bfloat16), whh,
            preferred_element_type=jnp.float32)                 # (Bp, 4H) f32

        # Single full-width sigmoid; tanh(x) = 2*sigmoid(2x) - 1 on the g lanes
        # (PyTorch gate order i, f, g, o).
        pre = jnp.where(g_mask, gates + gates, gates)           # VPU select
        s = jax.nn.sigmoid(pre)                                 # one EUP pass
        act = jnp.where(g_mask, s + s - 1.0, s)                 # VPU fixup

        i_g = act[:, 0:H]
        f_g = act[:, H:2 * H]
        g_g = act[:, 2 * H:3 * H]
        o_g = act[:, 3 * H:4 * H]

        c_new = f_g * c + i_g * g_g
        h_new = o_g * jnp.tanh(c_new)
        return h_new, c_new

    h0 = jnp.zeros((Bp, H), jnp.float32)
    c0 = jnp.zeros((Bp, H), jnp.float32)
    # Fully unroll only tiny trip counts; modest unroll otherwise to avoid
    # vreg-pressure spills and code-size blowup at large T.
    unroll = True if T <= 16 else 8
    h_last, _ = lax.fori_loop(0, T, step, (h0, c0), unroll=unroll)

    # ---- Phase 3: final FC on the last hidden state (lane-dense padded out).
    out_ref[...] = (jnp.dot(h_last.astype(jnp.bfloat16), fcw_ref[...],
                            preferred_element_type=jnp.float32)
                    + fcb_ref[...])


def rnn_model_forward(x, w_ih, w_hh, b, fc_w, fc_b):
    """x: (B, T, D) float32. Returns (B, O) = fc(lstm(x)[:, -1, :])."""
    B, T, D = x.shape
    H = w_hh.shape[0]
    O = fc_w.shape[1]

    Bp = ((max(B, 1) + 7) // 8) * 8            # pad batch to sublane width
    Op = ((max(O, 1) + 127) // 128) * 128      # lane-dense FC output width

    # Time-major + batch pad so each timestep is a contiguous, tile-aligned
    # sublane slab of the projected-gates scratch.  (Tiny HBM op at T=8; for
    # very long sequences fold this into the kernel instead — see TODO above.)
    x_p = jnp.pad(jnp.transpose(x, (1, 0, 2)),
                  ((0, 0), (0, Bp - B), (0, 0))).astype(jnp.bfloat16)  # (T,Bp,D)

    # bf16 matmul operands, f32 biases / accumulation.
    wih_b = w_ih.astype(jnp.bfloat16)                          # (D, 4H)
    whh_b = w_hh.astype(jnp.bfloat16)                          # (H, 4H)
    b2 = b.reshape(1, 4 * H).astype(jnp.float32)
    fcw_p = jnp.pad(fc_w, ((0, 0), (0, Op - O))).astype(jnp.bfloat16)  # (H, Op)
    fcb_p = jnp.pad(fc_b, (0, Op - O)).reshape(1, Op).astype(jnp.float32)

    # VMEM budget from the real working set (inputs + scratch + output),
    # double-buffering headroom included; never below 16 MiB so we don't
    # over-constrain the compiler's internal scratch.
    def _nbytes(shape, dtype):
        n = 1
        for s in shape:
            n *= s
        return n * jnp.dtype(dtype).itemsize
    working = (_nbytes(x_p.shape, x_p.dtype)
               + _nbytes(wih_b.shape, wih_b.dtype)
               + _nbytes(whh_b.shape, whh_b.dtype)
               + _nbytes(b2.shape, b2.dtype)
               + _nbytes(fcw_p.shape, fcw_p.dtype)
               + _nbytes(fcb_p.shape, fcb_p.dtype)
               + _nbytes((T * Bp, 4 * H), jnp.float32)          # xg scratch
               + _nbytes((Bp, Op), jnp.float32))                # output
    vmem_limit = max(16 * 1024 * 1024, 2 * working + (2 << 20))

    vmem_spec = pl.BlockSpec(memory_space=pltpu.MemorySpace.VMEM)
    out = pl.pallas_call(
        lstm_fc_kernel,
        out_shape=jax.ShapeDtypeStruct((Bp, Op), jnp.float32),
        in_specs=[vmem_spec] * 6,
        out_specs=vmem_spec,
        scratch_shapes=[pltpu.VMEM((T * Bp, 4 * H), jnp.float32)],
        compiler_params=pltpu.CompilerParams(vmem_limit_bytes=int(vmem_limit)),
    )(x_p, wih_b, whh_b, b2, fcw_p, fcb_p)

    return out[:B, :O]


def reference_forward(x, w_ih, w_hh, b, fc_w, fc_b):
    """Pure-JAX f32 LSTM reference (PyTorch gate order i, f, g, o)."""
    B, T, D = x.shape
    H = w_hh.shape[0]

    def step(carry, x_t):
        h, c = carry
        gates = x_t @ w_ih + h @ w_hh + b
        i = jax.nn.sigmoid(gates[:, 0:H])
        f = jax.nn.sigmoid(gates[:, H:2 * H])
        g = jnp.tanh(gates[:, 2 * H:3 * H])
        o = jax.nn.sigmoid(gates[:, 3 * H:4 * H])
        c = f * c + i * g
        h = o * jnp.tanh(c)
        return (h, c), h

    h0 = jnp.zeros((B, H), jnp.float32)
    c0 = jnp.zeros((B, H), jnp.float32)
    (h_last, _), _ = lax.scan(step, (h0, c0), jnp.transpose(x, (1, 0, 2)))
    return h_last @ fc_w + fc_b


if __name__ == "__main__":
    # Small shapes consistent with the module: seq model input (B, T, input_size)
    B, T = 2, 8
    input_size, hidden_size, output_size = 16, 32, 8

    key = jax.random.PRNGKey(0)
    kx, k1, k2, k3, k4, k5, k6 = jax.random.split(key, 7)

    # PyTorch-style uniform(-1/sqrt(H), 1/sqrt(H)) init, deterministic in-script.
    bound = 1.0 / (hidden_size ** 0.5)
    x = jax.random.normal(kx, (B, T, input_size), jnp.float32)
    # Stored transposed relative to PyTorch's (4H, D)/(4H, H); gate order i,f,g,o.
    w_ih = jax.random.uniform(k1, (input_size, 4 * hidden_size), jnp.float32,
                              -bound, bound)
    w_hh = jax.random.uniform(k2, (hidden_size, 4 * hidden_size), jnp.float32,
                              -bound, bound)
    b_ih = jax.random.uniform(k3, (4 * hidden_size,), jnp.float32, -bound, bound)
    b_hh = jax.random.uniform(k4, (4 * hidden_size,), jnp.float32, -bound, bound)
    b = b_ih + b_hh
    fc_w = jax.random.uniform(k5, (hidden_size, output_size), jnp.float32,
                              -bound, bound)
    fc_b = jax.random.uniform(k6, (output_size,), jnp.float32, -bound, bound)

    out = rnn_model_forward(x, w_ih, w_hh, b, fc_w, fc_b)
    out = jax.block_until_ready(out)

    ref = reference_forward(x, w_ih, w_hh, b, fc_w, fc_b)
    assert out.shape == (B, output_size)
    # Tolerance accounts for bf16 weight/activation quantization in the kernel
    # (f32 accumulation); kernel math is otherwise identical to the reference.
    assert jnp.allclose(out, ref, atol=3e-2, rtol=3e-2), "mismatch vs JAX reference"

    print("KERNEL_OK")
</pallas_src>

<mosaic_0001>
module attributes {stable_mosaic.version = 11 : i64} {
  func.func @lstm_fc_kernel(%arg0: memref<8x8x16xbf16, #tpu.memory_space<vmem>>, %arg1: memref<16x128xbf16, #tpu.memory_space<vmem>>, %arg2: memref<32x128xbf16, #tpu.memory_space<vmem>>, %arg3: memref<1x128xf32, #tpu.memory_space<vmem>>, %arg4: memref<32x128xbf16, #tpu.memory_space<vmem>>, %arg5: memref<1x128xf32, #tpu.memory_space<vmem>>, %arg6: memref<8x128xf32, #tpu.memory_space<vmem>>, %arg7: memref<64x128xf32, #tpu.memory_space<vmem>>) attributes {dimension_semantics = [], scalar_prefetch = 0 : i64, scratch_operands = 1 : i64, tpu.core_type = #tpu.core_type<tc>} {
    %c0 = arith.constant 0 : index
    %c0_0 = arith.constant 0 : index
    %c0_1 = arith.constant 0 : index
    %0 = vector.load %arg0[%c0, %c0_0, %c0_1] : memref<8x8x16xbf16, #tpu.memory_space<vmem>>, vector<8x8x16xbf16>
    %1 = vector.shape_cast %0 : vector<8x8x16xbf16> to vector<64x16xbf16>
    %c0_2 = arith.constant 0 : index
    %c0_3 = arith.constant 0 : index
    %2 = vector.load %arg1[%c0_2, %c0_3] : memref<16x128xbf16, #tpu.memory_space<vmem>>, vector<16x128xbf16>
    %cst = arith.constant dense<0.000000e+00> : vector<64x128xf32>
    %3 = tpu.matmul %1, %2, %cst {dimension_numbers = #tpu.dot_dimension_numbers<[1], [0], [0], [1], [0, 0, 1, 1], [], []>} : vector<64x16xbf16>, vector<16x128xbf16>, vector<64x128xf32> -> vector<64x128xf32>
    %c0_4 = arith.constant 0 : index
    %c0_5 = arith.constant 0 : index
    %4 = vector.load %arg3[%c0_4, %c0_5] : memref<1x128xf32, #tpu.memory_space<vmem>>, vector<1x128xf32>
    %5 = vector.broadcast %4 : vector<1x128xf32> to vector<64x128xf32>
    %6 = arith.addf %3, %5 : vector<64x128xf32>
    %c0_6 = arith.constant 0 : index
    %c0_7 = arith.constant 0 : index
    %7 = vector.load %arg7[%c0_6, %c0_7] : memref<64x128xf32, #tpu.memory_space<vmem>>, vector<64x128xf32>
    tpu.vector_store %arg7[%c0_6, %c0_7], %6 {strides = array<i32>} : memref<64x128xf32, #tpu.memory_space<vmem>>, vector<64x128xf32>,
    %c0_8 = arith.constant 0 : index
    %c0_9 = arith.constant 0 : index
    %8 = vector.load %arg2[%c0_8, %c0_9] : memref<32x128xbf16, #tpu.memory_space<vmem>>, vector<32x128xbf16>
    %9 = tpu.iota {dimensions = array<i32: 1>} : vector<8x128xi32>
    %c64_i32 = arith.constant 64 : i32
    %10 = vector.broadcast %c64_i32 : i32 to vector<8x128xi32>
    %11 = arith.cmpi sge, %9, %10 : vector<8x128xi32>
    %c96_i32 = arith.constant 96 : i32
    %12 = vector.broadcast %c96_i32 : i32 to vector<8x128xi32>
    %13 = arith.cmpi slt, %9, %12 : vector<8x128xi32>
    %14 = arith.andi %11, %13 : vector<8x128xi1>
    %cst_10 = arith.constant 0.000000e+00 : f32
    %15 = vector.broadcast %cst_10 : f32 to vector<8x32xf32>
    %cst_11 = arith.constant 0.000000e+00 : f32
    %16 = vector.broadcast %cst_11 : f32 to vector<8x32xf32>
    %c0_i32 = arith.constant 0 : i32
    %c8_i32 = arith.constant 8 : i32
    %17 = arith.muli %c0_i32, %c8_i32 : i32
    %18 = tpu.assume_multiple %17, 8 : i32
    %19 = arith.index_cast %18 : i32 to index
    %c0_12 = arith.constant 0 : index
    %20 = vector.load %arg7[%19, %c0_12] : memref<64x128xf32, #tpu.memory_space<vmem>>, vector<8x128xf32>
    %21 = arith.truncf %15 : vector<8x32xf32> to vector<8x32xbf16>
    %cst_13 = arith.constant dense<0.000000e+00> : vector<8x128xf32>
    %22 = tpu.matmul %21, %8, %cst_13 {dimension_numbers = #tpu.dot_dimension_numbers<[1], [0], [0], [1], [0, 0, 1, 1], [], []>} : vector<8x32xbf16>, vector<32x128xbf16>, vector<8x128xf32> -> vector<8x128xf32>
    %23 = arith.addf %20, %22 : vector<8x128xf32>
    %24 = arith.addf %23, %23 : vector<8x128xf32>
    %25 = arith.select %14, %24, %23 : vector<8x128xi1>, vector<8x128xf32>
    %26 = arith.negf %25 : vector<8x128xf32>
    %27 = math.exp %26 : vector<8x128xf32>
    %cst_14 = arith.constant 1.000000e+00 : f32
    %28 = vector.broadcast %cst_14 : f32 to vector<8x128xf32>
    %29 = arith.addf %28, %27 : vector<8x128xf32>
    %30 = arith.divf %28, %29 : vector<8x128xf32>
    %31 = arith.addf %30, %30 : vector<8x128xf32>
    %cst_15 = arith.constant 1.000000e+00 : f32
    %32 = vector.broadcast %cst_15 : f32 to vector<8x128xf32>
    %33 = arith.subf %31, %32 : vector<8x128xf32>
    %34 = arith.select %14, %33, %30 : vector<8x128xi1>, vector<8x128xf32>
    %35 = vector.extract_strided_slice %34 {offsets = [0, 0], sizes = [8, 32], strides = [1, 1]} : vector<8x128xf32> to vector<8x32xf32>
    %36 = vector.extract_strided_slice %34 {offsets = [0, 32], sizes = [8, 32], strides = [1, 1]} : vector<8x128xf32> to vector<8x32xf32>
    %37 = vector.extract_strided_slice %34 {offsets = [0, 64], sizes = [8, 32], strides = [1, 1]} : vector<8x128xf32> to vector<8x32xf32>
    %38 = vector.extract_strided_slice %34 {offsets = [0, 96], sizes = [8, 32], strides = [1, 1]} : vector<8x128xf32> to vector<8x32xf32>
    %39 = arith.mulf %36, %16 : vector<8x32xf32>
    %40 = arith.mulf %35, %37 : vector<8x32xf32>
    %41 = arith.addf %39, %40 : vector<8x32xf32>
    %42 = math.tanh %41 : vector<8x32xf32>
    %43 = arith.mulf %38, %42 : vector<8x32xf32>
    %c1_i32 = arith.constant 1 : i32
    %c8_i32_16 = arith.constant 8 : i32
    %44 = arith.muli %c1_i32, %c8_i32_16 : i32
    %45 = tpu.assume_multiple %44, 8 : i32
    %46 = arith.index_cast %45 : i32 to index
    %c0_17 = arith.constant 0 : index
    %47 = vector.load %arg7[%46, %c0_17] : memref<64x128xf32, #tpu.memory_space<vmem>>, vector<8x128xf32>
    %48 = arith.truncf %43 : vector<8x32xf32> to vector<8x32xbf16>
    %cst_18 = arith.constant dense<0.000000e+00> : vector<8x128xf32>
    %49 = tpu.matmul %48, %8, %cst_18 {dimension_numbers = #tpu.dot_dimension_numbers<[1], [0], [0], [1], [0, 0, 1, 1], [], []>} : vector<8x32xbf16>, vector<32x128xbf16>, vector<8x128xf32> -> vector<8x128xf32>
    %50 = arith.addf %47, %49 : vector<8x128xf32>
    %51 = arith.addf %50, %50 : vector<8x128xf32>
    %52 = arith.select %14, %51, %50 : vector<8x128xi1>, vector<8x128xf32>
    %53 = arith.negf %52 : vector<8x128xf32>
    %54 = math.exp %53 : vector<8x128xf32>
    %cst_19 = arith.constant 1.000000e+00 : f32
    %55 = vector.broadcast %cst_19 : f32 to vector<8x128xf32>
    %56 = arith.addf %55, %54 : vector<8x128xf32>
    %57 = arith.divf %55, %56 : vector<8x128xf32>
    %58 = arith.addf %57, %57 : vector<8x128xf32>
    %cst_20 = arith.constant 1.000000e+00 : f32
    %59 = vector.broadcast %cst_20 : f32 to vector<8x128xf32>
    %60 = arith.subf %58, %59 : vector<8x128xf32>
    %61 = arith.select %14, %60, %57 : vector<8x128xi1>, vector<8x128xf32>
    %62 = vector.extract_strided_slice %61 {offsets = [0, 0], sizes = [8, 32], strides = [1, 1]} : vector<8x128xf32> to vector<8x32xf32>
    %63 = vector.extract_strided_slice %61 {offsets = [0, 32], sizes = [8, 32], strides = [1, 1]} : vector<8x128xf32> to vector<8x32xf32>
    %64 = vector.extract_strided_slice %61 {offsets = [0, 64], sizes = [8, 32], strides = [1, 1]} : vector<8x128xf32> to vector<8x32xf32>
    %65 = vector.extract_strided_slice %61 {offsets = [0, 96], sizes = [8, 32], strides = [1, 1]} : vector<8x128xf32> to vector<8x32xf32>
    %66 = arith.mulf %63, %41 : vector<8x32xf32>
    %67 = arith.mulf %62, %64 : vector<8x32xf32>
    %68 = arith.addf %66, %67 : vector<8x32xf32>
    %69 = math.tanh %68 : vector<8x32xf32>
    %70 = arith.mulf %65, %69 : vector<8x32xf32>
    %c2_i32 = arith.constant 2 : i32
    %c8_i32_21 = arith.constant 8 : i32
    %71 = arith.muli %c2_i32, %c8_i32_21 : i32
    %72 = tpu.assume_multiple %71, 8 : i32
    %73 = arith.index_cast %72 : i32 to index
    %c0_22 = arith.constant 0 : index
    %74 = vector.load %arg7[%73, %c0_22] : memref<64x128xf32, #tpu.memory_space<vmem>>, vector<8x128xf32>
    %75 = arith.truncf %70 : vector<8x32xf32> to vector<8x32xbf16>
    %cst_23 = arith.constant dense<0.000000e+00> : vector<8x128xf32>
    %76 = tpu.matmul %75, %8, %cst_23 {dimension_numbers = #tpu.dot_dimension_numbers<[1], [0], [0], [1], [0, 0, 1, 1], [], []>} : vector<8x32xbf16>, vector<32x128xbf16>, vector<8x128xf32> -> vector<8x128xf32>
    %77 = arith.addf %74, %76 : vector<8x128xf32>
    %78 = arith.addf %77, %77 : vector<8x128xf32>
    %79 = arith.select %14, %78, %77 : vector<8x128xi1>, vector<8x128xf32>
    %80 = arith.negf %79 : vector<8x128xf32>
    %81 = math.exp %80 : vector<8x128xf32>
    %cst_24 = arith.constant 1.000000e+00 : f32
    %82 = vector.broadcast %cst_24 : f32 to vector<8x128xf32>
    %83 = arith.addf %82, %81 : vector<8x128xf32>
    %84 = arith.divf %82, %83 : vector<8x128xf32>
    %85 = arith.addf %84, %84 : vector<8x128xf32>
    %cst_25 = arith.constant 1.000000e+00 : f32
    %86 = vector.broadcast %cst_25 : f32 to vector<8x128xf32>
    %87 = arith.subf %85, %86 : vector<8x128xf32>
    %88 = arith.select %14, %87, %84 : vector<8x128xi1>, vector<8x128xf32>
    %89 = vector.extract_strided_slice %88 {offsets = [0, 0], sizes = [8, 32], strides = [1, 1]} : vector<8x128xf32> to vector<8x32xf32>
    %90 = vector.extract_strided_slice %88 {offsets = [0, 32], sizes = [8, 32], strides = [1, 1]} : vector<8x128xf32> to vector<8x32xf32>
    %91 = vector.extract_strided_slice %88 {offsets = [0, 64], sizes = [8, 32], strides = [1, 1]} : vector<8x128xf32> to vector<8x32xf32>
    %92 = vector.extract_strided_slice %88 {offsets = [0, 96], sizes = [8, 32], strides = [1, 1]} : vector<8x128xf32> to vector<8x32xf32>
    %93 = arith.mulf %90, %68 : vector<8x32xf32>
    %94 = arith.mulf %89, %91 : vector<8x32xf32>
    %95 = arith.addf %93, %94 : vector<8x32xf32>
    %96 = math.tanh %95 : vector<8x32xf32>
    %97 = arith.mulf %92, %96 : vector<8x32xf32>
    %c3_i32 = arith.constant 3 : i32
    %c8_i32_26 = arith.constant 8 : i32
    %98 = arith.muli %c3_i32, %c8_i32_26 : i32
    %99 = tpu.assume_multiple %98, 8 : i32
    %100 = arith.index_cast %99 : i32 to index
    %c0_27 = arith.constant 0 : index
    %101 = vector.load %arg7[%100, %c0_27] : memref<64x128xf32, #tpu.memory_space<vmem>>, vector<8x128xf32>
    %102 = arith.truncf %97 : vector<8x32xf32> to vector<8x32xbf16>
    %cst_28 = arith.constant dense<0.000000e+00> : vector<8x128xf32>
    %103 = tpu.matmul %102, %8, %cst_28 {dimension_numbers = #tpu.dot_dimension_numbers<[1], [0], [0], [1], [0, 0, 1, 1], [], []>} : vector<8x32xbf16>, vector<32x128xbf16>, vector<8x128xf32> -> vector<8x128xf32>
    %104 = arith.addf %101, %103 : vector<8x128xf32>
    %105 = arith.addf %104, %104 : vector<8x128xf32>
    %106 = arith.select %14, %105, %104 : vector<8x128xi1>, vector<8x128xf32>
    %107 = arith.negf %106 : vector<8x128xf32>
    %108 = math.exp %107 : vector<8x128xf32>
    %cst_29 = arith.constant 1.000000e+00 : f32
    %109 = vector.broadcast %cst_29 : f32 to vector<8x128xf32>
    %110 = arith.addf %109, %108 : vector<8x128xf32>
    %111 = arith.divf %109, %110 : vector<8x128xf32>
    %112 = arith.addf %111, %111 : vector<8x128xf32>
    %cst_30 = arith.constant 1.000000e+00 : f32
    %113 = vector.broadcast %cst_30 : f32 to vector<8x128xf32>
    %114 = arith.subf %112, %113 : vector<8x128xf32>
    %115 = arith.select %14, %114, %111 : vector<8x128xi1>, vector<8x128xf32>
    %116 = vector.extract_strided_slice %115 {offsets = [0, 0], sizes = [8, 32], strides = [1, 1]} : vector<8x128xf32> to vector<8x32xf32>
    %117 = vector.extract_strided_slice %115 {offsets = [0, 32], sizes = [8, 32], strides = [1, 1]} : vector<8x128xf32> to vector<8x32xf32>
    %118 = vector.extract_strided_slice %115 {offsets = [0, 64], sizes = [8, 32], strides = [1, 1]} : vector<8x128xf32> to vector<8x32xf32>
    %119 = vector.extract_strided_slice %115 {offsets = [0, 96], sizes = [8, 32], strides = [1, 1]} : vector<8x128xf32> to vector<8x32xf32>
    %120 = arith.mulf %117, %95 : vector<8x32xf32>
    %121 = arith.mulf %116, %118 : vector<8x32xf32>
    %122 = arith.addf %120, %121 : vector<8x32xf32>
    %123 = math.tanh %122 : vector<8x32xf32>
    %124 = arith.mulf %119, %123 : vector<8x32xf32>
    %c4_i32 = arith.constant 4 : i32
    %c8_i32_31 = arith.constant 8 : i32
    %125 = arith.muli %c4_i32, %c8_i32_31 : i32
    %126 = tpu.assume_multiple %125, 8 : i32
    %127 = arith.index_cast %126 : i32 to index
    %c0_32 = arith.constant 0 : index
    %128 = vector.load %arg7[%127, %c0_32] : memref<64x128xf32, #tpu.memory_space<vmem>>, vector<8x128xf32>
    %129 = arith.truncf %124 : vector<8x32xf32> to vector<8x32xbf16>
    %cst_33 = arith.constant dense<0.000000e+00> : vector<8x128xf32>
    %130 = tpu.matmul %129, %8, %cst_33 {dimension_numbers = #tpu.dot_dimension_numbers<[1], [0], [0], [1], [0, 0, 1, 1], [], []>} : vector<8x32xbf16>, vector<32x128xbf16>, vector<8x128xf32> -> vector<8x128xf32>
    %131 = arith.addf %128, %130 : vector<8x128xf32>
    %132 = arith.addf %131, %131 : vector<8x128xf32>
    %133 = arith.select %14, %132, %131 : vector<8x128xi1>, vector<8x128xf32>
    %134 = arith.negf %133 : vector<8x128xf32>
    %135 = math.exp %134 : vector<8x128xf32>
    %cst_34 = arith.constant 1.000000e+00 : f32
    %136 = vector.broadcast %cst_34 : f32 to vector<8x128xf32>
    %137 = arith.addf %136, %135 : vector<8x128xf32>
    %138 = arith.divf %136, %137 : vector<8x128xf32>
    %139 = arith.addf %138, %138 : vector<8x128xf32>
    %cst_35 = arith.constant 1.000000e+00 : f32
    %140 = vector.broadcast %cst_35 : f32 to vector<8x128xf32>
    %141 = arith.subf %139, %140 : vector<8x128xf32>
    %142 = arith.select %14, %141, %138 : vector<8x128xi1>, vector<8x128xf32>
    %143 = vector.extract_strided_slice %142 {offsets = [0, 0], sizes = [8, 32], strides = [1, 1]} : vector<8x128xf32> to vector<8x32xf32>
    %144 = vector.extract_strided_slice %142 {offsets = [0, 32], sizes = [8, 32], strides = [1, 1]} : vector<8x128xf32> to vector<8x32xf32>
    %145 = vector.extract_strided_slice %142 {offsets = [0, 64], sizes = [8, 32], strides = [1, 1]} : vector<8x128xf32> to vector<8x32xf32>
    %146 = vector.extract_strided_slice %142 {offsets = [0, 96], sizes = [8, 32], strides = [1, 1]} : vector<8x128xf32> to vector<8x32xf32>
    %147 = arith.mulf %144, %122 : vector<8x32xf32>
    %148 = arith.mulf %143, %145 : vector<8x32xf32>
    %149 = arith.addf %147, %148 : vector<8x32xf32>
    %150 = math.tanh %149 : vector<8x32xf32>
    %151 = arith.mulf %146, %150 : vector<8x32xf32>
    %c5_i32 = arith.constant 5 : i32
    %c8_i32_36 = arith.constant 8 : i32
    %152 = arith.muli %c5_i32, %c8_i32_36 : i32
    %153 = tpu.assume_multiple %152, 8 : i32
    %154 = arith.index_cast %153 : i32 to index
    %c0_37 = arith.constant 0 : index
    %155 = vector.load %arg7[%154, %c0_37] : memref<64x128xf32, #tpu.memory_space<vmem>>, vector<8x128xf32>
    %156 = arith.truncf %151 : vector<8x32xf32> to vector<8x32xbf16>
    %cst_38 = arith.constant dense<0.000000e+00> : vector<8x128xf32>
    %157 = tpu.matmul %156, %8, %cst_38 {dimension_numbers = #tpu.dot_dimension_numbers<[1], [0], [0], [1], [0, 0, 1, 1], [], []>} : vector<8x32xbf16>, vector<32x128xbf16>, vector<8x128xf32> -> vector<8x128xf32>
    %158 = arith.addf %155, %157 : vector<8x128xf32>
    %159 = arith.addf %158, %158 : vector<8x128xf32>
    %160 = arith.select %14, %159, %158 : vector<8x128xi1>, vector<8x128xf32>
    %161 = arith.negf %160 : vector<8x128xf32>
    %162 = math.exp %161 : vector<8x128xf32>
    %cst_39 = arith.constant 1.000000e+00 : f32
    %163 = vector.broadcast %cst_39 : f32 to vector<8x128xf32>
    %164 = arith.addf %163, %162 : vector<8x128xf32>
    %165 = arith.divf %163, %164 : vector<8x128xf32>
    %166 = arith.addf %165, %165 : vector<8x128xf32>
    %cst_40 = arith.constant 1.000000e+00 : f32
    %167 = vector.broadcast %cst_40 : f32 to vector<8x128xf32>
    %168 = arith.subf %166, %167 : vector<8x128xf32>
    %169 = arith.select %14, %168, %165 : vector<8x128xi1>, vector<8x128xf32>
    %170 = vector.extract_strided_slice %169 {offsets = [0, 0], sizes = [8, 32], strides = [1, 1]} : vector<8x128xf32> to vector<8x32xf32>
    %171 = vector.extract_strided_slice %169 {offsets = [0, 32], sizes = [8, 32], strides = [1, 1]} : vector<8x128xf32> to vector<8x32xf32>
    %172 = vector.extract_strided_slice %169 {offsets = [0, 64], sizes = [8, 32], strides = [1, 1]} : vector<8x128xf32> to vector<8x32xf32>
    %173 = vector.extract_strided_slice %169 {offsets = [0, 96], sizes = [8, 32], strides = [1, 1]} : vector<8x128xf32> to vector<8x32xf32>
    %174 = arith.mulf %171, %149 : vector<8x32xf32>
    %175 = arith.mulf %170, %172 : vector<8x32xf32>
    %176 = arith.addf %174, %175 : vector<8x32xf32>
    %177 = math.tanh %176 : vector<8x32xf32>
    %178 = arith.mulf %173, %177 : vector<8x32xf32>
    %c6_i32 = arith.constant 6 : i32
    %c8_i32_41 = arith.constant 8 : i32
    %179 = arith.muli %c6_i32, %c8_i32_41 : i32
    %180 = tpu.assume_multiple %179, 8 : i32
    %181 = arith.index_cast %180 : i32 to index
    %c0_42 = arith.constant 0 : index
    %182 = vector.load %arg7[%181, %c0_42] : memref<64x128xf32, #tpu.memory_space<vmem>>, vector<8x128xf32>
    %183 = arith.truncf %178 : vector<8x32xf32> to vector<8x32xbf16>
    %cst_43 = arith.constant dense<0.000000e+00> : vector<8x128xf32>
    %184 = tpu.matmul %183, %8, %cst_43 {dimension_numbers = #tpu.dot_dimension_numbers<[1], [0], [0], [1], [0, 0, 1, 1], [], []>} : vector<8x32xbf16>, vector<32x128xbf16>, vector<8x128xf32> -> vector<8x128xf32>
    %185 = arith.addf %182, %184 : vector<8x128xf32>
    %186 = arith.addf %185, %185 : vector<8x128xf32>
    %187 = arith.select %14, %186, %185 : vector<8x128xi1>, vector<8x128xf32>
    %188 = arith.negf %187 : vector<8x128xf32>
    %189 = math.exp %188 : vector<8x128xf32>
    %cst_44 = arith.constant 1.000000e+00 : f32
    %190 = vector.broadcast %cst_44 : f32 to vector<8x128xf32>
    %191 = arith.addf %190, %189 : vector<8x128xf32>
    %192 = arith.divf %190, %191 : vector<8x128xf32>
    %193 = arith.addf %192, %192 : vector<8x128xf32>
    %cst_45 = arith.constant 1.000000e+00 : f32
    %194 = vector.broadcast %cst_45 : f32 to vector<8x128xf32>
    %195 = arith.subf %193, %194 : vector<8x128xf32>
    %196 = arith.select %14, %195, %192 : vector<8x128xi1>, vector<8x128xf32>
    %197 = vector.extract_strided_slice %196 {offsets = [0, 0], sizes = [8, 32], strides = [1, 1]} : vector<8x128xf32> to vector<8x32xf32>
    %198 = vector.extract_strided_slice %196 {offsets = [0, 32], sizes = [8, 32], strides = [1, 1]} : vector<8x128xf32> to vector<8x32xf32>
    %199 = vector.extract_strided_slice %196 {offsets = [0, 64], sizes = [8, 32], strides = [1, 1]} : vector<8x128xf32> to vector<8x32xf32>
    %200 = vector.extract_strided_slice %196 {offsets = [0, 96], sizes = [8, 32], strides = [1, 1]} : vector<8x128xf32> to vector<8x32xf32>
    %201 = arith.mulf %198, %176 : vector<8x32xf32>
    %202 = arith.mulf %197, %199 : vector<8x32xf32>
    %203 = arith.addf %201, %202 : vector<8x32xf32>
    %204 = math.tanh %203 : vector<8x32xf32>
    %205 = arith.mulf %200, %204 : vector<8x32xf32>
    %c7_i32 = arith.constant 7 : i32
    %c8_i32_46 = arith.constant 8 : i32
    %206 = arith.muli %c7_i32, %c8_i32_46 : i32
    %207 = tpu.assume_multiple %206, 8 : i32
    %208 = arith.index_cast %207 : i32 to index
    %c0_47 = arith.constant 0 : index
    %209 = vector.load %arg7[%208, %c0_47] : memref<64x128xf32, #tpu.memory_space<vmem>>, vector<8x128xf32>
    %210 = arith.truncf %205 : vector<8x32xf32> to vector<8x32xbf16>
    %cst_48 = arith.constant dense<0.000000e+00> : vector<8x128xf32>
    %211 = tpu.matmul %210, %8, %cst_48 {dimension_numbers = #tpu.dot_dimension_numbers<[1], [0], [0], [1], [0, 0, 1, 1], [], []>} : vector<8x32xbf16>, vector<32x128xbf16>, vector<8x128xf32> -> vector<8x128xf32>
    %212 = arith.addf %209, %211 : vector<8x128xf32>
    %213 = arith.addf %212, %212 : vector<8x128xf32>
    %214 = arith.select %14, %213, %212 : vector<8x128xi1>, vector<8x128xf32>
    %215 = arith.negf %214 : vector<8x128xf32>
    %216 = math.exp %215 : vector<8x128xf32>
    %cst_49 = arith.constant 1.000000e+00 : f32
    %217 = vector.broadcast %cst_49 : f32 to vector<8x128xf32>
    %218 = arith.addf %217, %216 : vector<8x128xf32>
    %219 = arith.divf %217, %218 : vector<8x128xf32>
    %220 = arith.addf %219, %219 : vector<8x128xf32>
    %cst_50 = arith.constant 1.000000e+00 : f32
    %221 = vector.broadcast %cst_50 : f32 to vector<8x128xf32>
    %222 = arith.subf %220, %221 : vector<8x128xf32>
    %223 = arith.select %14, %222, %219 : vector<8x128xi1>, vector<8x128xf32>
    %224 = vector.extract_strided_slice %223 {offsets = [0, 0], sizes = [8, 32], strides = [1, 1]} : vector<8x128xf32> to vector<8x32xf32>
    %225 = vector.extract_strided_slice %223 {offsets = [0, 32], sizes = [8, 32], strides = [1, 1]} : vector<8x128xf32> to vector<8x32xf32>
    %226 = vector.extract_strided_slice %223 {offsets = [0, 64], sizes = [8, 32], strides = [1, 1]} : vector<8x128xf32> to vector<8x32xf32>
    %227 = vector.extract_strided_slice %223 {offsets = [0, 96], sizes = [8, 32], strides = [1, 1]} : vector<8x128xf32> to vector<8x32xf32>
    %228 = arith.mulf %225, %203 : vector<8x32xf32>
    %229 = arith.mulf %224, %226 : vector<8x32xf32>
    %230 = arith.addf %228, %229 : vector<8x32xf32>
    %231 = math.tanh %230 : vector<8x32xf32>
    %232 = arith.mulf %227, %231 : vector<8x32xf32>
    %c8_i32_51 = arith.constant 8 : i32
    %233 = arith.truncf %232 : vector<8x32xf32> to vector<8x32xbf16>
    %c0_52 = arith.constant 0 : index
    %c0_53 = arith.constant 0 : index
    %234 = vector.load %arg4[%c0_52, %c0_53] : memref<32x128xbf16, #tpu.memory_space<vmem>>, vector<32x128xbf16>
    %cst_54 = arith.constant dense<0.000000e+00> : vector<8x128xf32>
    %235 = tpu.matmul %233, %234, %cst_54 {dimension_numbers = #tpu.dot_dimension_numbers<[1], [0], [0], [1], [0, 0, 1, 1], [], []>} : vector<8x32xbf16>, vector<32x128xbf16>, vector<8x128xf32> -> vector<8x128xf32>
    %c0_55 = arith.constant 0 : index
    %c0_56 = arith.constant 0 : index
    %236 = vector.load %arg5[%c0_55, %c0_56] : memref<1x128xf32, #tpu.memory_space<vmem>>, vector<1x128xf32>
    %237 = vector.broadcast %236 : vector<1x128xf32> to vector<8x128xf32>
    %238 = arith.addf %235, %237 : vector<8x128xf32>
    %c0_57 = arith.constant 0 : index
    %c0_58 = arith.constant 0 : index
    %239 = vector.load %arg6[%c0_57, %c0_58] : memref<8x128xf32, #tpu.memory_space<vmem>>, vector<8x128xf32>
    tpu.vector_store %arg6[%c0_57, %c0_58], %238 {strides = array<i32>} : memref<8x128xf32, #tpu.memory_space<vmem>>, vector<8x128xf32>,
    return
  }
}

</mosaic_0001>

<llo_original>
// kernel: tpu_custom_call.1
$region0: #{tpu_custom_call.1}
  #allocation0 [shape = 'u32[]', space=smem, size = 0x4, offset = 0x4, fixed_abs, tag = 'smem constant byte address 0x4 - core index']
  #allocation1 [shape = 'u32[144,128]{1,0:T(1,128)}', space=vmem, size = 0x12000, scoped, tag = 'internal scratch']
  #allocation2 [shape = 'f32[64,128]{1,0:T(8,128)}', space=vmem, size = 0x8000, scoped, tag = 'scratch operand']
  %s0 = inlined_call_operand.hbm [shape: bf16[8,8,16], index: 0, kind: input, shape index: {}]
  %s1 = inlined_call_operand.hbm [shape: bf16[16,128], index: 1, kind: input, shape index: {}]
  %s2 = inlined_call_operand.hbm [shape: bf16[32,128], index: 2, kind: input, shape index: {}]
  %s3 = inlined_call_operand.vmem [shape: f32[1,128], index: 3, kind: input, shape index: {}]
  %s4 = inlined_call_operand.hbm [shape: bf16[32,128], index: 4, kind: input, shape index: {}]
  %s5 = inlined_call_operand.vmem [shape: f32[1,128], index: 5, kind: input, shape index: {}]
  %s6 = inlined_call_operand.hbm [shape: f32[8,128], index: 6, kind: output, shape index: {}]
  %s7 = sld [smem:[#allocation0]]
  $region50: #{tpu_custom_call.1} parent=0
    _
  %s9 = ssub.s32 1, %s7
  %s10 = scalar_select 0, %s9, %s7
  $region1: #{tpu_custom_call.1} parent=0
    #allocation3 [shape = 'u8[16384]{0}', space=vmem, size = 0x4000, scoped, tag = 'input window, operand 0, single buffered']
    #allocation4 [shape = 's32[1]{0}', space=sflag, size = 0x4, scoped, tag = 'scoped memory for tpu_custom_call.1']
    #allocation5 [shape = 's32[1]{0}', space=sflag, size = 0x4, scoped, tag = 'scoped memory for tpu_custom_call.1']
    #allocation6 [shape = 'u8[4096]{0}', space=vmem, size = 0x1000, scoped, tag = 'input window, operand 1, single buffered']
    #allocation7 [shape = 's32[1]{0}', space=sflag, size = 0x4, scoped, tag = 'scoped memory for tpu_custom_call.1']
    #allocation8 [shape = 'u8[8192]{0}', space=vmem, size = 0x2000, scoped, tag = 'input window, operand 2, single buffered']
    #allocation9 [shape = 'u8[8192]{0}', space=vmem, size = 0x2000, scoped, tag = 'input window, operand 4, single buffered']
    #allocation10 [shape = 's32[1]{0}', space=sflag, size = 0x4, scoped, tag = 'scoped memory for tpu_custom_call.1']
    #allocation11 [shape = 'u8[4096]{0}', space=vmem, size = 0x1000, scoped, tag = 'output window, operand 0, single buffered']
    %11 = vsyncpa [#allocation4], 0
    %12 = vsyncpa [#allocation7], 0
    %13 = vsyncpa [#allocation10], 0
    %14 = vsyncpa [#allocation5], 0
    // Predicated region
    $region2: #{tpu_custom_call.1} parent=1 // pred_check
      _
    $region3: #{tpu_custom_call.1} parent=1 // pred_check_branch
      %16 = sbr.rel (0) target = $region5
    $region4: #{tpu_custom_call.1} parent=1 // pred_region
      %s18 = ssub.s32 512, 512
      %19 = vsyncadd [#allocation4], %s18
      %s20 = sshll.u32 [#allocation3], 4
      %s21 = int_to_ptr.vmem [resolvable:$true] %s20
      %26 = dma.hbm_to_vmem [thread:$0]  %s0, 512, %s21, [#allocation4], 64, 64, 4
    $region5: #{tpu_custom_call.1} parent=1 // pred_fallthru
      _
    // Predicated region
    $region6: #{tpu_custom_call.1} parent=1 // pred_check
      _
    $region7: #{tpu_custom_call.1} parent=1 // pred_check_branch
      %28 = sbr.rel (0) target = $region9
    $region8: #{tpu_custom_call.1} parent=1 // pred_region
      %s30 = ssub.s32 128, 128
      %31 = vsyncadd [#allocation7], %s30
      %s32 = sshll.u32 [#allocation6], 4
      %s33 = int_to_ptr.vmem [resolvable:$true] %s32
      %38 = dma.hbm_to_vmem [thread:$0]  %s1, 128, %s33, [#allocation7], 64, 64, 4
    $region9: #{tpu_custom_call.1} parent=1 // pred_fallthru
      _
    // Predicated region
    $region10: #{tpu_custom_call.1} parent=1 // pred_check
      _
    $region11: #{tpu_custom_call.1} parent=1 // pred_check_branch
      %40 = sbr.rel (0) target = $region13
    $region12: #{tpu_custom_call.1} parent=1 // pred_region
      %s42 = ssub.s32 256, 256
      %43 = vsyncadd [#allocation7], %s42
      %s44 = sshll.u32 [#allocation8], 4
      %s45 = int_to_ptr.vmem [resolvable:$true] %s44
      %50 = dma.hbm_to_vmem [thread:$0]  %s2, 256, %s45, [#allocation7], 64, 64, 4
    $region13: #{tpu_custom_call.1} parent=1 // pred_fallthru
      _
    // Predicated region
    $region14: #{tpu_custom_call.1} parent=1 // pred_check
      _
    $region15: #{tpu_custom_call.1} parent=1 // pred_check_branch
      %52 = sbr.rel (0) target = $region17
    $region16: #{tpu_custom_call.1} parent=1 // pred_region
      _
    $region17: #{tpu_custom_call.1} parent=1 // pred_fallthru
      _
    // Predicated region
    $region18: #{tpu_custom_call.1} parent=1 // pred_check
      _
    $region19: #{tpu_custom_call.1} parent=1 // pred_check_branch
      %54 = sbr.rel (0) target = $region21
    $region20: #{tpu_custom_call.1} parent=1 // pred_region
      %s56 = ssub.s32 256, 256
      %57 = vsyncadd [#allocation10], %s56
      %s58 = sshll.u32 [#allocation9], 4
      %s59 = int_to_ptr.vmem [resolvable:$true] %s58
      %64 = dma.hbm_to_vmem [thread:$0]  %s4, 256, %s59, [#allocation10], 64, 64, 4
    $region21: #{tpu_custom_call.1} parent=1 // pred_fallthru
      _
    // Predicated region
    $region22: #{tpu_custom_call.1} parent=1 // pred_check
      _
    $region23: #{tpu_custom_call.1} parent=1 // pred_check_branch
      %66 = sbr.rel (0) target = $region25
    $region24: #{tpu_custom_call.1} parent=1 // pred_region
      _
    $region25: #{tpu_custom_call.1} parent=1 // pred_fallthru
      _
    // Predicated region
    $region26: #{tpu_custom_call.1} parent=1 // pred_check
      _
    $region27: #{tpu_custom_call.1} parent=1 // pred_check_branch
      %68 = sbr.rel (0) target = $region29
    $region28: #{tpu_custom_call.1} parent=1 // pred_region
      %69 = dma.done [#allocation4], 512
    $region29: #{tpu_custom_call.1} parent=1 // pred_fallthru
      _
    // Predicated region
    $region30: #{tpu_custom_call.1} parent=1 // pred_check
      _
    $region31: #{tpu_custom_call.1} parent=1 // pred_check_branch
      %71 = sbr.rel (0) target = $region33
    $region32: #{tpu_custom_call.1} parent=1 // pred_region
      %72 = dma.done [#allocation7], 128
    $region33: #{tpu_custom_call.1} parent=1 // pred_fallthru
      _
    // Predicated region
    $region34: #{tpu_custom_call.1} parent=1 // pred_check
      _
    $region35: #{tpu_custom_call.1} parent=1 // pred_check_branch
      %74 = sbr.rel (0) target = $region37
    $region36: #{tpu_custom_call.1} parent=1 // pred_region
      %75 = dma.done [#allocation7], 256
    $region37: #{tpu_custom_call.1} parent=1 // pred_fallthru
      _
    // Predicated region
    $region38: #{tpu_custom_call.1} parent=1 // pred_check
      _
    $region39: #{tpu_custom_call.1} parent=1 // pred_check_branch
      %77 = sbr.rel (0) target = $region41
    $region40: #{tpu_custom_call.1} parent=1 // pred_region
      %78 = dma.done [#allocation10], 256
    $region41: #{tpu_custom_call.1} parent=1 // pred_fallthru
      _
    %v80 = vld [vmem:[#allocation3] sm:$0xf]
    %v81 = vld [vmem:[#allocation3 + $0x4] sm:$0xf]
    %v82 = vld [vmem:[#allocation3 + $0x8] sm:$0xf]
    %v83 = vld [vmem:[#allocation3 + $0xc] sm:$0xf]
    %v84 = vld [vmem:[#allocation3 + $0x10] sm:$0xf]
    %v85 = vld [vmem:[#allocation3 + $0x14] sm:$0xf]
    %v86 = vld [vmem:[#allocation3 + $0x18] sm:$0xf]
    %v87 = vld [vmem:[#allocation3 + $0x1c] sm:$0xf]
    %v88 = vld [vmem:[#allocation6] sm:$0xf]
    %v89 = vld [vmem:[#allocation6 + $0x4] sm:$0xf]
    %v90 = vld [vmem:[%s3] sm:$0x1]
    %v92 = vlaneseq
    %v93 = vshrl.u32 %v92, 7
    %v94 = vsub.s32 0, %v93
    %v95 = vrot.slane %v90, %v94
    %v105 = vunpack.c.l.b16 %v80
    %v106 = vunpack.c.l.b16 %v81
    %v107 = vunpack.c.l.b16 %v82
    %v108 = vunpack.c.l.b16 %v83
    %v109 = vunpack.c.l.b16 %v84
    %v110 = vunpack.c.l.b16 %v85
    %v111 = vunpack.c.l.b16 %v86
    %v112 = vunpack.c.l.b16 %v87
    %v113 = vpack.c.b16 %v106, %v105
    %v114 = vpack.c.b16 %v108, %v107
    %v115 = vpack.c.b16 %v110, %v109
    %v116 = vpack.c.b16 %v112, %v111
    %v119 = vunpack.c.l.b16 %v88
    %v120 = vunpack.c.l.b16 %v89
    %v121 = vpack.c.b16 %v120, %v119
    %vm123 = vcmask 130048
    %v125 = vsel %vm123, %v113, 0
    %v128 = vsel %vm123, %v114, 0
    %v131 = vsel %vm123, %v115, 0
    %v134 = vsel %vm123, %v116, 0
    %136 = vmatprep.subr.bf16.mxu0 0
    %137 = vmatpush1.bf16.msra.mxu0 0
    %138 = vmatprep.subr.bf16.mxu0 0
    %139 = vmatpush1.bf16.msra.mxu0 0
    %140 = vmatprep.subr.bf16.mxu0 0
    %141 = vmatpush1.bf16.msra.mxu0 0
    %142 = vmatprep.subr.bf16.mxu0 0
    %143 = vmatpush1.bf16.msra.mxu0 0
    %144 = vmatprep.subr.bf16.mxu0 0
    %145 = vmatpush1.bf16.msra.mxu0 0
    %146 = vmatprep.subr.bf16.mxu0 0
    %147 = vmatpush1.bf16.msra.mxu0 0
    %148 = vmatprep.subr.bf16.mxu0 0
    %149 = vmatpush1.bf16.msra.mxu0 0
    %150 = vmatprep.subr.bf16.mxu0 0
    %151 = vmatpush1.bf16.msra.mxu0 %v121
    %152 = vmatprep.subr.bf16.mxu0 0
    %153 = vmatpush2.bf16.msra.mxu0 0
    %154 = vmatprep.subr.bf16.mxu0 0
    %155 = vmatpush2.bf16.msra.mxu0 0
    %156 = vmatprep.subr.bf16.mxu0 0
    %157 = vmatpush2.bf16.msra.mxu0 0
    %158 = vmatprep.subr.bf16.mxu0 0
    %159 = vmatpush2.bf16.msra.mxu0 0
    %160 = vmatprep.subr.bf16.mxu0 0
    %161 = vmatpush2.bf16.msra.mxu0 0
    %162 = vmatprep.subr.bf16.mxu0 0
    %163 = vmatpush2.bf16.msra.mxu0 0
    %164 = vmatprep.subr.bf16.mxu0 0
    %165 = vmatpush2.bf16.msra.mxu0 0
    %166 = vmatprep.subr.bf16.mxu0 0
    %167 = vmatpush2.bf16.msra.mxu0 0
    %168 = vmatprep.mubr.bf16.mxu0 0
    %169 = vmatmul.mubr.bf16.gmra.mxu0 %v125
    %v170 = vpop.f32.mrf.mxu0
    %v171 = vadd.f32 %v95, %v170
    %v172 = vpop.f32.mrf.mxu0
    %v173 = vpop.f32.mrf.mxu0
    %v174 = vadd.f32 %v95, %v173
    %v175 = vpop.f32.mrf.mxu0
    %176 = vmatprep.mubr.bf16.mxu0 0
    %177 = vmatmul.mubr.bf16.gmra.mxu0 %v128
    %v178 = vpop.f32.mrf.mxu0
    %v179 = vadd.f32 %v95, %v178
    %v180 = vpop.f32.mrf.mxu0
    %v181 = vpop.f32.mrf.mxu0
    %v182 = vadd.f32 %v95, %v181
    %v183 = vpop.f32.mrf.mxu0
    %184 = vmatprep.mubr.bf16.mxu0 0
    %185 = vmatmul.mubr.bf16.gmra.mxu0 %v131
    %v186 = vpop.f32.mrf.mxu0
    %v187 = vadd.f32 %v95, %v186
    %v188 = vpop.f32.mrf.mxu0
    %v189 = vpop.f32.mrf.mxu0
    %v190 = vadd.f32 %v95, %v189
    %v191 = vpop.f32.mrf.mxu0
    %192 = vmatprep.mubr.bf16.mxu0 0
    %193 = vmatmul.mubr.bf16.gmra.mxu0 %v134
    %v194 = vpop.f32.mrf.mxu0
    %v195 = vadd.f32 %v95, %v194
    %v196 = vpop.f32.mrf.mxu0
    %v197 = vpop.f32.mrf.mxu0
    %v198 = vadd.f32 %v95, %v197
    %v199 = vpop.f32.mrf.mxu0
    %200 = vdwg.mxu0
    %201 = vst [vmem:[#allocation2] sm:$0xff] %v171
    %202 = vst [vmem:[#allocation2 + $0x8] sm:$0xff] %v174
    %203 = vst [vmem:[#allocation2 + $0x10] sm:$0xff] %v179
    %204 = vst [vmem:[#allocation2 + $0x18] sm:$0xff] %v182
    %205 = vst [vmem:[#allocation2 + $0x20] sm:$0xff] %v187
    %206 = vst [vmem:[#allocation2 + $0x28] sm:$0xff] %v190
    %207 = vst [vmem:[#allocation2 + $0x30] sm:$0xff] %v195
    %208 = vst [vmem:[#allocation2 + $0x38] sm:$0xff] %v198
    %v209 = vld [vmem:[#allocation8] sm:$0xf]
    %v210 = vld [vmem:[#allocation8 + $0x4] sm:$0xf]
    %v211 = vld [vmem:[#allocation8 + $0x8] sm:$0xf]
    %v212 = vld [vmem:[#allocation8 + $0xc] sm:$0xf]
    %v213 = vlaneseq
    %v214 = vand.u32 %v213, 127
    %vm215 = vcmp.ge.s32.totalorder %v214, 64
    %vm216 = vcmp.lt.s32.totalorder %v214, 96
    %vm217 = vmand %vm215, %vm216
    %v218 = vld [vmem:[#allocation2] sm:$0xff]
    %v223 = vunpack.c.l.b16 %v209
    %v224 = vunpack.c.l.b16 %v210
    %v225 = vunpack.c.l.b16 %v211
    %v226 = vunpack.c.l.b16 %v212
    %v227 = vpack.c.b16 %v224, %v223
    %v228 = vpack.c.b16 %v226, %v225
    %vm231 = vcmask 261120
    %v233 = vsel %vm231, 0, 0
    %235 = vmatprep.subr.bf16.mxu0 0
    %236 = vmatpush1.bf16.msra.mxu0 0
    %237 = vmatprep.subr.bf16.mxu0 0
    %238 = vmatpush1.bf16.msra.mxu0 0
    %239 = vmatprep.subr.bf16.mxu0 0
    %240 = vmatpush1.bf16.msra.mxu0 0
    %241 = vmatprep.subr.bf16.mxu0 0
    %242 = vmatpush1.bf16.msra.mxu0 0
    %243 = vmatprep.subr.bf16.mxu0 0
    %244 = vmatpush1.bf16.msra.mxu0 0
    %245 = vmatprep.subr.bf16.mxu0 0
    %246 = vmatpush1.bf16.msra.mxu0 0
    %247 = vmatprep.subr.bf16.mxu0 0
    %248 = vmatpush1.bf16.msra.mxu0 %v228
    %249 = vmatprep.subr.bf16.mxu0 0
    %250 = vmatpush1.bf16.msra.mxu0 %v227
    %251 = vmatprep.subr.bf16.mxu0 0
    %252 = vmatpush2.bf16.msra.mxu0 0
    %253 = vmatprep.subr.bf16.mxu0 0
    %254 = vmatpush2.bf16.msra.mxu0 0
    %255 = vmatprep.subr.bf16.mxu0 0
    %256 = vmatpush2.bf16.msra.mxu0 0
    %257 = vmatprep.subr.bf16.mxu0 0
    %258 = vmatpush2.bf16.msra.mxu0 0
    %259 = vmatprep.subr.bf16.mxu0 0
    %260 = vmatpush2.bf16.msra.mxu0 0
    %261 = vmatprep.subr.bf16.mxu0 0
    %262 = vmatpush2.bf16.msra.mxu0 0
    %263 = vmatprep.subr.bf16.mxu0 0
    %264 = vmatpush2.bf16.msra.mxu0 0
    %265 = vmatprep.subr.bf16.mxu0 0
    %266 = vmatpush2.bf16.msra.mxu0 0
    %267 = vmatprep.mubr.bf16.mxu0 0
    %268 = vmatmul.mubr.bf16.gmra.mxu0 %v233
    %v269 = vpop.f32.mrf.mxu0
    %v270 = vadd.f32 0.0, %v269
    %v271 = vpop.f32.mrf.mxu0
    %v272 = vpop.f32.mrf.mxu0
    %v273 = vpop.f32.mrf.mxu0
    %274 = vdwg.mxu0
    %v275 = vadd.f32 %v218, %v270
    %v276 = vadd.f32 %v275, %v275
    %v277 = vsel %vm217, %v276, %v275
    %v278 = vxor.u32 %v277, 2147483648
    %v279 = vmul.f32 %v278, 1.442695
    %v280 = vpow.pop %v279
    %v281 = vadd.f32 %v280, 1.0
    %v282 = vrcp.pop %v281
    %v283 = vmul.f32 1.0, %v282
    %v284 = vadd.f32 %v283, %v283
    %v285 = vsub.f32 %v284, 1.0
    %v286 = vsel %vm217, %v285, %v283
    %v287 = vmul.f32 %v286, 0.0
    %289 = vrot.lane.b32.xlu0 %v286, 64
    %v290 = vpop.permute.xlu0 %289
    %v292 = vmul.f32 %v286, %v290
    %294 = vrot.lane.b32.xlu0 %v292, 32
    %v295 = vpop.permute.xlu0 %294
    %v297 = vadd.f32 %v287, %v295
    %v298 = vtanh.pop %v297
    %300 = vrot.lane.b32.xlu0 %v298, 64
    %v301 = vpop.permute.xlu0 %300
    %v303 = vmul.f32 %v286, %v301
    %s304 = scalar_lea.vmem [#allocation2], 8
    %v305 = vld [vmem:[%s304] sm:$0xff]
    %v306 = vpack.c.bf16 %v303, %v303
    %308 = vrot.lane.b32.xlu0 %v306, 32
    %v309 = vpop.permute.xlu0 %308
    %v311 = vsel %vm231, %v309, 0
    %313 = vmatprep.subr.bf16.mxu0 0
    %314 = vmatpush1.bf16.msra.mxu0 0
    %315 = vmatprep.subr.bf16.mxu0 0
    %316 = vmatpush1.bf16.msra.mxu0 0
    %317 = vmatprep.subr.bf16.mxu0 0
    %318 = vmatpush1.bf16.msra.mxu0 0
    %319 = vmatprep.subr.bf16.mxu0 0
    %320 = vmatpush1.bf16.msra.mxu0 0
    %321 = vmatprep.subr.bf16.mxu0 0
    %322 = vmatpush1.bf16.msra.mxu0 0
    %323 = vmatprep.subr.bf16.mxu0 0
    %324 = vmatpush1.bf16.msra.mxu0 0
    %325 = vmatprep.subr.bf16.mxu0 0
    %326 = vmatpush1.bf16.msra.mxu0 %v228
    %327 = vmatprep.subr.bf16.mxu0 0
    %328 = vmatpush1.bf16.msra.mxu0 %v227
    %329 = vmatprep.subr.bf16.mxu0 0
    %330 = vmatpush2.bf16.msra.mxu0 0
    %331 = vmatprep.subr.bf16.mxu0 0
    %332 = vmatpush2.bf16.msra.mxu0 0
    %333 = vmatprep.subr.bf16.mxu0 0
    %334 = vmatpush2.bf16.msra.mxu0 0
    %335 = vmatprep.subr.bf16.mxu0 0
    %336 = vmatpush2.bf16.msra.mxu0 0
    %337 = vmatprep.subr.bf16.mxu0 0
    %338 = vmatpush2.bf16.msra.mxu0 0
    %339 = vmatprep.subr.bf16.mxu0 0
    %340 = vmatpush2.bf16.msra.mxu0 0
    %341 = vmatprep.subr.bf16.mxu0 0
    %342 = vmatpush2.bf16.msra.mxu0 0
    %343 = vmatprep.subr.bf16.mxu0 0
    %344 = vmatpush2.bf16.msra.mxu0 0
    %345 = vmatprep.mubr.bf16.mxu0 0
    %346 = vmatmul.mubr.bf16.gmra.mxu0 %v311
    %v347 = vpop.f32.mrf.mxu0
    %v348 = vadd.f32 0.0, %v347
    %v349 = vpop.f32.mrf.mxu0
    %v350 = vpop.f32.mrf.mxu0
    %v351 = vpop.f32.mrf.mxu0
    %352 = vdwg.mxu0
    %v353 = vadd.f32 %v305, %v348
    %v354 = vadd.f32 %v353, %v353
    %v355 = vsel %vm217, %v354, %v353
    %v356 = vxor.u32 %v355, 2147483648
    %v357 = vmul.f32 %v356, 1.442695
    %v358 = vpow.pop %v357
    %v359 = vadd.f32 %v358, 1.0
    %v360 = vrcp.pop %v359
    %v361 = vmul.f32 1.0, %v360
    %v362 = vadd.f32 %v361, %v361
    %v363 = vsub.f32 %v362, 1.0
    %v364 = vsel %vm217, %v363, %v361
    %v365 = vmul.f32 %v364, %v297
    %367 = vrot.lane.b32.xlu0 %v364, 64
    %v368 = vpop.permute.xlu0 %367
    %v370 = vmul.f32 %v364, %v368
    %372 = vrot.lane.b32.xlu0 %v370, 32
    %v373 = vpop.permute.xlu0 %372
    %v375 = vadd.f32 %v365, %v373
    %v376 = vtanh.pop %v375
    %378 = vrot.lane.b32.xlu0 %v376, 64
    %v379 = vpop.permute.xlu0 %378
    %v381 = vmul.f32 %v364, %v379
    %s382 = scalar_lea.vmem [#allocation2], 16
    %v383 = vld [vmem:[%s382] sm:$0xff]
    %v384 = vpack.c.bf16 %v381, %v381
    %386 = vrot.lane.b32.xlu0 %v384, 32
    %v387 = vpop.permute.xlu0 %386
    %v389 = vsel %vm231, %v387, 0
    %391 = vmatprep.subr.bf16.mxu0 0
    %392 = vmatpush1.bf16.msra.mxu0 0
    %393 = vmatprep.subr.bf16.mxu0 0
    %394 = vmatpush1.bf16.msra.mxu0 0
    %395 = vmatprep.subr.bf16.mxu0 0
    %396 = vmatpush1.bf16.msra.mxu0 0
    %397 = vmatprep.subr.bf16.mxu0 0
    %398 = vmatpush1.bf16.msra.mxu0 0
    %399 = vmatprep.subr.bf16.mxu0 0
    %400 = vmatpush1.bf16.msra.mxu0 0
    %401 = vmatprep.subr.bf16.mxu0 0
    %402 = vmatpush1.bf16.msra.mxu0 0
    %403 = vmatprep.subr.bf16.mxu0 0
    %404 = vmatpush1.bf16.msra.mxu0 %v228
    %405 = vmatprep.subr.bf16.mxu0 0
    %406 = vmatpush1.bf16.msra.mxu0 %v227
    %407 = vmatprep.subr.bf16.mxu0 0
    %408 = vmatpush2.bf16.msra.mxu0 0
    %409 = vmatprep.subr.bf16.mxu0 0
    %410 = vmatpush2.bf16.msra.mxu0 0
    %411 = vmatprep.subr.bf16.mxu0 0
    %412 = vmatpush2.bf16.msra.mxu0 0
    %413 = vmatprep.subr.bf16.mxu0 0
    %414 = vmatpush2.bf16.msra.mxu0 0
    %415 = vmatprep.subr.bf16.mxu0 0
    %416 = vmatpush2.bf16.msra.mxu0 0
    %417 = vmatprep.subr.bf16.mxu0 0
    %418 = vmatpush2.bf16.msra.mxu0 0
    %419 = vmatprep.subr.bf16.mxu0 0
    %420 = vmatpush2.bf16.msra.mxu0 0
    %421 = vmatprep.subr.bf16.mxu0 0
    %422 = vmatpush2.bf16.msra.mxu0 0
    %423 = vmatprep.mubr.bf16.mxu0 0
    %424 = vmatmul.mubr.bf16.gmra.mxu0 %v389
    %v425 = vpop.f32.mrf.mxu0
    %v426 = vadd.f32 0.0, %v425
    %v427 = vpop.f32.mrf.mxu0
    %v428 = vpop.f32.mrf.mxu0
    %v429 = vpop.f32.mrf.mxu0
    %430 = vdwg.mxu0
    %v431 = vadd.f32 %v383, %v426
    %v432 = vadd.f32 %v431, %v431
    %v433 = vsel %vm217, %v432, %v431
    %v434 = vxor.u32 %v433, 2147483648
    %v435 = vmul.f32 %v434, 1.442695
    %v436 = vpow.pop %v435
    %v437 = vadd.f32 %v436, 1.0
    %v438 = vrcp.pop %v437
    %v439 = vmul.f32 1.0, %v438
    %v440 = vadd.f32 %v439, %v439
    %v441 = vsub.f32 %v440, 1.0
    %v442 = vsel %vm217, %v441, %v439
    %v443 = vmul.f32 %v442, %v375
    %445 = vrot.lane.b32.xlu0 %v442, 64
    %v446 = vpop.permute.xlu0 %445
    %v448 = vmul.f32 %v442, %v446
    %450 = vrot.lane.b32.xlu0 %v448, 32
    %v451 = vpop.permute.xlu0 %450
    %v453 = vadd.f32 %v443, %v451
    %v454 = vtanh.pop %v453
    %456 = vrot.lane.b32.xlu0 %v454, 64
    %v457 = vpop.permute.xlu0 %456
    %v459 = vmul.f32 %v442, %v457
    %s460 = scalar_lea.vmem [#allocation2], 24
    %v461 = vld [vmem:[%s460] sm:$0xff]
    %v462 = vpack.c.bf16 %v459, %v459
    %464 = vrot.lane.b32.xlu0 %v462, 32
    %v465 = vpop.permute.xlu0 %464
    %v467 = vsel %vm231, %v465, 0
    %469 = vmatprep.subr.bf16.mxu0 0
    %470 = vmatpush1.bf16.msra.mxu0 0
    %471 = vmatprep.subr.bf16.mxu0 0
    %472 = vmatpush1.bf16.msra.mxu0 0
    %473 = vmatprep.subr.bf16.mxu0 0
    %474 = vmatpush1.bf16.msra.mxu0 0
    %475 = vmatprep.subr.bf16.mxu0 0
    %476 = vmatpush1.bf16.msra.mxu0 0
    %477 = vmatprep.subr.bf16.mxu0 0
    %478 = vmatpush1.bf16.msra.mxu0 0
    %479 = vmatprep.subr.bf16.mxu0 0
    %480 = vmatpush1.bf16.msra.mxu0 0
    %481 = vmatprep.subr.bf16.mxu0 0
    %482 = vmatpush1.bf16.msra.mxu0 %v228
    %483 = vmatprep.subr.bf16.mxu0 0
    %484 = vmatpush1.bf16.msra.mxu0 %v227
    %485 = vmatprep.subr.bf16.mxu0 0
    %486 = vmatpush2.bf16.msra.mxu0 0
    %487 = vmatprep.subr.bf16.mxu0 0
    %488 = vmatpush2.bf16.msra.mxu0 0
    %489 = vmatprep.subr.bf16.mxu0 0
    %490 = vmatpush2.bf16.msra.mxu0 0
    %491 = vmatprep.subr.bf16.mxu0 0
    %492 = vmatpush2.bf16.msra.mxu0 0
    %493 = vmatprep.subr.bf16.mxu0 0
    %494 = vmatpush2.bf16.msra.mxu0 0
    %495 = vmatprep.subr.bf16.mxu0 0
    %496 = vmatpush2.bf16.msra.mxu0 0
    %497 = vmatprep.subr.bf16.mxu0 0
    %498 = vmatpush2.bf16.msra.mxu0 0
    %499 = vmatprep.subr.bf16.mxu0 0
    %500 = vmatpush2.bf16.msra.mxu0 0
    %501 = vmatprep.mubr.bf16.mxu0 0
    %502 = vmatmul.mubr.bf16.gmra.mxu0 %v467
    %v503 = vpop.f32.mrf.mxu0
    %v504 = vadd.f32 0.0, %v503
    %v505 = vpop.f32.mrf.mxu0
    %v506 = vpop.f32.mrf.mxu0
    %v507 = vpop.f32.mrf.mxu0
    %508 = vdwg.mxu0
    %v509 = vadd.f32 %v461, %v504
    %v510 = vadd.f32 %v509, %v509
    %v511 = vsel %vm217, %v510, %v509
    %v512 = vxor.u32 %v511, 2147483648
    %v513 = vmul.f32 %v512, 1.442695
    %v514 = vpow.pop %v513
    %v515 = vadd.f32 %v514, 1.0
    %v516 = vrcp.pop %v515
    %v517 = vmul.f32 1.0, %v516
    %v518 = vadd.f32 %v517, %v517
    %v519 = vsub.f32 %v518, 1.0
    %v520 = vsel %vm217, %v519, %v517
    %v521 = vmul.f32 %v520, %v453
    %523 = vrot.lane.b32.xlu0 %v520, 64
    %v524 = vpop.permute.xlu0 %523
    %v526 = vmul.f32 %v520, %v524
    %528 = vrot.lane.b32.xlu0 %v526, 32
    %v529 = vpop.permute.xlu0 %528
    %v531 = vadd.f32 %v521, %v529
    %v532 = vtanh.pop %v531
    %534 = vrot.lane.b32.xlu0 %v532, 64
    %v535 = vpop.permute.xlu0 %534
    %v537 = vmul.f32 %v520, %v535
    %s538 = scalar_lea.vmem [#allocation2], 32
    %v539 = vld [vmem:[%s538] sm:$0xff]
    %v540 = vpack.c.bf16 %v537, %v537
    %542 = vrot.lane.b32.xlu0 %v540, 32
    %v543 = vpop.permute.xlu0 %542
    %v545 = vsel %vm231, %v543, 0
    %547 = vmatprep.subr.bf16.mxu0 0
    %548 = vmatpush1.bf16.msra.mxu0 0
    %549 = vmatprep.subr.bf16.mxu0 0
    %550 = vmatpush1.bf16.msra.mxu0 0
    %551 = vmatprep.subr.bf16.mxu0 0
    %552 = vmatpush1.bf16.msra.mxu0 0
    %553 = vmatprep.subr.bf16.mxu0 0
    %554 = vmatpush1.bf16.msra.mxu0 0
    %555 = vmatprep.subr.bf16.mxu0 0
    %556 = vmatpush1.bf16.msra.mxu0 0
    %557 = vmatprep.subr.bf16.mxu0 0
    %558 = vmatpush1.bf16.msra.mxu0 0
    %559 = vmatprep.subr.bf16.mxu0 0
    %560 = vmatpush1.bf16.msra.mxu0 %v228
    %561 = vmatprep.subr.bf16.mxu0 0
    %562 = vmatpush1.bf16.msra.mxu0 %v227
    %563 = vmatprep.subr.bf16.mxu0 0
    %564 = vmatpush2.bf16.msra.mxu0 0
    %565 = vmatprep.subr.bf16.mxu0 0
    %566 = vmatpush2.bf16.msra.mxu0 0
    %567 = vmatprep.subr.bf16.mxu0 0
    %568 = vmatpush2.bf16.msra.mxu0 0
    %569 = vmatprep.subr.bf16.mxu0 0
    %570 = vmatpush2.bf16.msra.mxu0 0
    %571 = vmatprep.subr.bf16.mxu0 0
    %572 = vmatpush2.bf16.msra.mxu0 0
    %573 = vmatprep.subr.bf16.mxu0 0
    %574 = vmatpush2.bf16.msra.mxu0 0
    %575 = vmatprep.subr.bf16.mxu0 0
    %576 = vmatpush2.bf16.msra.mxu0 0
    %577 = vmatprep.subr.bf16.mxu0 0
    %578 = vmatpush2.bf16.msra.mxu0 0
    %579 = vmatprep.mubr.bf16.mxu0 0
    %580 = vmatmul.mubr.bf16.gmra.mxu0 %v545
    %v581 = vpop.f32.mrf.mxu0
    %v582 = vadd.f32 0.0, %v581
    %v583 = vpop.f32.mrf.mxu0
    %v584 = vpop.f32.mrf.mxu0
    %v585 = vpop.f32.mrf.mxu0
    %586 = vdwg.mxu0
    %v587 = vadd.f32 %v539, %v582
    %v588 = vadd.f32 %v587, %v587
    %v589 = vsel %vm217, %v588, %v587
    %v590 = vxor.u32 %v589, 2147483648
    %v591 = vmul.f32 %v590, 1.442695
    %v592 = vpow.pop %v591
    %v593 = vadd.f32 %v592, 1.0
    %v594 = vrcp.pop %v593
    %v595 = vmul.f32 1.0, %v594
    %v596 = vadd.f32 %v595, %v595
    %v597 = vsub.f32 %v596, 1.0
    %v598 = vsel %vm217, %v597, %v595
    %v599 = vmul.f32 %v598, %v531
    %601 = vrot.lane.b32.xlu0 %v598, 64
    %v602 = vpop.permute.xlu0 %601
    %v604 = vmul.f32 %v598, %v602
    %606 = vrot.lane.b32.xlu0 %v604, 32
    %v607 = vpop.permute.xlu0 %606
    %v609 = vadd.f32 %v599, %v607
    %v610 = vtanh.pop %v609
    %612 = vrot.lane.b32.xlu0 %v610, 64
    %v613 = vpop.permute.xlu0 %612
    %v615 = vmul.f32 %v598, %v613
    %s616 = scalar_lea.vmem [#allocation2], 40
    %v617 = vld [vmem:[%s616] sm:$0xff]
    %v618 = vpack.c.bf16 %v615, %v615
    %620 = vrot.lane.b32.xlu0 %v618, 32
    %v621 = vpop.permute.xlu0 %620
    %v623 = vsel %vm231, %v621, 0
    %625 = vmatprep.subr.bf16.mxu0 0
    %626 = vmatpush1.bf16.msra.mxu0 0
    %627 = vmatprep.subr.bf16.mxu0 0
    %628 = vmatpush1.bf16.msra.mxu0 0
    %629 = vmatprep.subr.bf16.mxu0 0
    %630 = vmatpush1.bf16.msra.mxu0 0
    %631 = vmatprep.subr.bf16.mxu0 0
    %632 = vmatpush1.bf16.msra.mxu0 0
    %633 = vmatprep.subr.bf16.mxu0 0
    %634 = vmatpush1.bf16.msra.mxu0 0
    %635 = vmatprep.subr.bf16.mxu0 0
    %636 = vmatpush1.bf16.msra.mxu0 0
    %637 = vmatprep.subr.bf16.mxu0 0
    %638 = vmatpush1.bf16.msra.mxu0 %v228
    %639 = vmatprep.subr.bf16.mxu0 0
    %640 = vmatpush1.bf16.msra.mxu0 %v227
    %641 = vmatprep.subr.bf16.mxu0 0
    %642 = vmatpush2.bf16.msra.mxu0 0
    %643 = vmatprep.subr.bf16.mxu0 0
    %644 = vmatpush2.bf16.msra.mxu0 0
    %645 = vmatprep.subr.bf16.mxu0 0
    %646 = vmatpush2.bf16.msra.mxu0 0
    %647 = vmatprep.subr.bf16.mxu0 0
    %648 = vmatpush2.bf16.msra.mxu0 0
    %649 = vmatprep.subr.bf16.mxu0 0
    %650 = vmatpush2.bf16.msra.mxu0 0
    %651 = vmatprep.subr.bf16.mxu0 0
    %652 = vmatpush2.bf16.msra.mxu0 0
    %653 = vmatprep.subr.bf16.mxu0 0
    %654 = vmatpush2.bf16.msra.mxu0 0
    %655 = vmatprep.subr.bf16.mxu0 0
    %656 = vmatpush2.bf16.msra.mxu0 0
    %657 = vmatprep.mubr.bf16.mxu0 0
    %658 = vmatmul.mubr.bf16.gmra.mxu0 %v623
    %v659 = vpop.f32.mrf.mxu0
    %v660 = vadd.f32 0.0, %v659
    %v661 = vpop.f32.mrf.mxu0
    %v662 = vpop.f32.mrf.mxu0
    %v663 = vpop.f32.mrf.mxu0
    %664 = vdwg.mxu0
    %v665 = vadd.f32 %v617, %v660
    %v666 = vadd.f32 %v665, %v665
    %v667 = vsel %vm217, %v666, %v665
    %v668 = vxor.u32 %v667, 2147483648
    %v669 = vmul.f32 %v668, 1.442695
    %v670 = vpow.pop %v669
    %v671 = vadd.f32 %v670, 1.0
    %v672 = vrcp.pop %v671
    %v673 = vmul.f32 1.0, %v672
    %v674 = vadd.f32 %v673, %v673
    %v675 = vsub.f32 %v674, 1.0
    %v676 = vsel %vm217, %v675, %v673
    %v677 = vmul.f32 %v676, %v609
    %679 = vrot.lane.b32.xlu0 %v676, 64
    %v680 = vpop.permute.xlu0 %679
    %v682 = vmul.f32 %v676, %v680
    %684 = vrot.lane.b32.xlu0 %v682, 32
    %v685 = vpop.permute.xlu0 %684
    %v687 = vadd.f32 %v677, %v685
    %v688 = vtanh.pop %v687
    %690 = vrot.lane.b32.xlu0 %v688, 64
    %v691 = vpop.permute.xlu0 %690
    %v693 = vmul.f32 %v676, %v691
    %s694 = scalar_lea.vmem [#allocation2], 48
    %v695 = vld [vmem:[%s694] sm:$0xff]
    %v696 = vpack.c.bf16 %v693, %v693
    %698 = vrot.lane.b32.xlu0 %v696, 32
    %v699 = vpop.permute.xlu0 %698
    %v701 = vsel %vm231, %v699, 0
    %703 = vmatprep.subr.bf16.mxu0 0
    %704 = vmatpush1.bf16.msra.mxu0 0
    %705 = vmatprep.subr.bf16.mxu0 0
    %706 = vmatpush1.bf16.msra.mxu0 0
    %707 = vmatprep.subr.bf16.mxu0 0
    %708 = vmatpush1.bf16.msra.mxu0 0
    %709 = vmatprep.subr.bf16.mxu0 0
    %710 = vmatpush1.bf16.msra.mxu0 0
    %711 = vmatprep.subr.bf16.mxu0 0
    %712 = vmatpush1.bf16.msra.mxu0 0
    %713 = vmatprep.subr.bf16.mxu0 0
    %714 = vmatpush1.bf16.msra.mxu0 0
    %715 = vmatprep.subr.bf16.mxu0 0
    %716 = vmatpush1.bf16.msra.mxu0 %v228
    %717 = vmatprep.subr.bf16.mxu0 0
    %718 = vmatpush1.bf16.msra.mxu0 %v227
    %719 = vmatprep.subr.bf16.mxu0 0
    %720 = vmatpush2.bf16.msra.mxu0 0
    %721 = vmatprep.subr.bf16.mxu0 0
    %722 = vmatpush2.bf16.msra.mxu0 0
    %723 = vmatprep.subr.bf16.mxu0 0
    %724 = vmatpush2.bf16.msra.mxu0 0
    %725 = vmatprep.subr.bf16.mxu0 0
    %726 = vmatpush2.bf16.msra.mxu0 0
    %727 = vmatprep.subr.bf16.mxu0 0
    %728 = vmatpush2.bf16.msra.mxu0 0
    %729 = vmatprep.subr.bf16.mxu0 0
    %730 = vmatpush2.bf16.msra.mxu0 0
    %731 = vmatprep.subr.bf16.mxu0 0
    %732 = vmatpush2.bf16.msra.mxu0 0
    %733 = vmatprep.subr.bf16.mxu0 0
    %734 = vmatpush2.bf16.msra.mxu0 0
    %735 = vmatprep.mubr.bf16.mxu0 0
    %736 = vmatmul.mubr.bf16.gmra.mxu0 %v701
    %v737 = vpop.f32.mrf.mxu0
    %v738 = vadd.f32 0.0, %v737
    %v739 = vpop.f32.mrf.mxu0
    %v740 = vpop.f32.mrf.mxu0
    %v741 = vpop.f32.mrf.mxu0
    %742 = vdwg.mxu0
    %v743 = vadd.f32 %v695, %v738
    %v744 = vadd.f32 %v743, %v743
    %v745 = vsel %vm217, %v744, %v743
    %v746 = vxor.u32 %v745, 2147483648
    %v747 = vmul.f32 %v746, 1.442695
    %v748 = vpow.pop %v747
    %v749 = vadd.f32 %v748, 1.0
    %v750 = vrcp.pop %v749
    %v751 = vmul.f32 1.0, %v750
    %v752 = vadd.f32 %v751, %v751
    %v753 = vsub.f32 %v752, 1.0
    %v754 = vsel %vm217, %v753, %v751
    %v755 = vmul.f32 %v754, %v687
    %757 = vrot.lane.b32.xlu0 %v754, 64
    %v758 = vpop.permute.xlu0 %757
    %v760 = vmul.f32 %v754, %v758
    %762 = vrot.lane.b32.xlu0 %v760, 32
    %v763 = vpop.permute.xlu0 %762
    %v765 = vadd.f32 %v755, %v763
    %v766 = vtanh.pop %v765
    %768 = vrot.lane.b32.xlu0 %v766, 64
    %v769 = vpop.permute.xlu0 %768
    %v771 = vmul.f32 %v754, %v769
    %s772 = scalar_lea.vmem [#allocation2], 56
    %v773 = vld [vmem:[%s772] sm:$0xff]
    %v774 = vpack.c.bf16 %v771, %v771
    %776 = vrot.lane.b32.xlu0 %v774, 32
    %v777 = vpop.permute.xlu0 %776
    %v779 = vsel %vm231, %v777, 0
    %781 = vmatprep.subr.bf16.mxu0 0
    %782 = vmatpush1.bf16.msra.mxu0 0
    %783 = vmatprep.subr.bf16.mxu0 0
    %784 = vmatpush1.bf16.msra.mxu0 0
    %785 = vmatprep.subr.bf16.mxu0 0
    %786 = vmatpush1.bf16.msra.mxu0 0
    %787 = vmatprep.subr.bf16.mxu0 0
    %788 = vmatpush1.bf16.msra.mxu0 0
    %789 = vmatprep.subr.bf16.mxu0 0
    %790 = vmatpush1.bf16.msra.mxu0 0
    %791 = vmatprep.subr.bf16.mxu0 0
    %792 = vmatpush1.bf16.msra.mxu0 0
    %793 = vmatprep.subr.bf16.mxu0 0
    %794 = vmatpush1.bf16.msra.mxu0 %v228
    %795 = vmatprep.subr.bf16.mxu0 0
    %796 = vmatpush1.bf16.msra.mxu0 %v227
    %797 = vmatprep.subr.bf16.mxu0 0
    %798 = vmatpush2.bf16.msra.mxu0 0
    %799 = vmatprep.subr.bf16.mxu0 0
    %800 = vmatpush2.bf16.msra.mxu0 0
    %801 = vmatprep.subr.bf16.mxu0 0
    %802 = vmatpush2.bf16.msra.mxu0 0
    %803 = vmatprep.subr.bf16.mxu0 0
    %804 = vmatpush2.bf16.msra.mxu0 0
    %805 = vmatprep.subr.bf16.mxu0 0
    %806 = vmatpush2.bf16.msra.mxu0 0
    %807 = vmatprep.subr.bf16.mxu0 0
    %808 = vmatpush2.bf16.msra.mxu0 0
    %809 = vmatprep.subr.bf16.mxu0 0
    %810 = vmatpush2.bf16.msra.mxu0 0
    %811 = vmatprep.subr.bf16.mxu0 0
    %812 = vmatpush2.bf16.msra.mxu0 0
    %813 = vmatprep.mubr.bf16.mxu0 0
    %814 = vmatmul.mubr.bf16.gmra.mxu0 %v779
    %v815 = vpop.f32.mrf.mxu0
    %v816 = vadd.f32 0.0, %v815
    %v817 = vpop.f32.mrf.mxu0
    %v818 = vpop.f32.mrf.mxu0
    %v819 = vpop.f32.mrf.mxu0
    %820 = vdwg.mxu0
    %v821 = vadd.f32 %v773, %v816
    %v822 = vadd.f32 %v821, %v821
    %v823 = vsel %vm217, %v822, %v821
    %v824 = vxor.u32 %v823, 2147483648
    %v825 = vmul.f32 %v824, 1.442695
    %v826 = vpow.pop %v825
    %v827 = vadd.f32 %v826, 1.0
    %v828 = vrcp.pop %v827
    %v829 = vmul.f32 1.0, %v828
    %v830 = vadd.f32 %v829, %v829
    %v831 = vsub.f32 %v830, 1.0
    %v832 = vsel %vm217, %v831, %v829
    %v833 = vmul.f32 %v832, %v765
    %835 = vrot.lane.b32.xlu0 %v832, 64
    %v836 = vpop.permute.xlu0 %835
    %v838 = vmul.f32 %v832, %v836
    %840 = vrot.lane.b32.xlu0 %v838, 32
    %v841 = vpop.permute.xlu0 %840
    %v843 = vadd.f32 %v833, %v841
    %v844 = vtanh.pop %v843
    %846 = vrot.lane.b32.xlu0 %v844, 64
    %v847 = vpop.permute.xlu0 %846
    %v849 = vmul.f32 %v832, %v847
    %v850 = vpack.c.bf16 %v849, %v849
    %v851 = vld [vmem:[#allocation9] sm:$0xf]
    %v852 = vld [vmem:[#allocation9 + $0x4] sm:$0xf]
    %v853 = vld [vmem:[#allocation9 + $0x8] sm:$0xf]
    %v854 = vld [vmem:[#allocation9 + $0xc] sm:$0xf]
    %v855 = vld [vmem:[%s5] sm:$0x1]
    %v857 = vlaneseq
    %v858 = vshrl.u32 %v857, 7
    %v859 = vsub.s32 0, %v858
    %v860 = vrot.slane %v855, %v859
    %863 = vrot.lane.b32.xlu0 %v850, 32
    %v864 = vpop.permute.xlu0 %863
    %v869 = vunpack.c.l.b16 %v851
    %v870 = vunpack.c.l.b16 %v852
    %v871 = vunpack.c.l.b16 %v853
    %v872 = vunpack.c.l.b16 %v854
    %v873 = vpack.c.b16 %v870, %v869
    %v874 = vpack.c.b16 %v872, %v871
    %v878 = vsel %vm231, %v864, 0
    %880 = vmatprep.subr.bf16.mxu0 0
    %881 = vmatpush1.bf16.msra.mxu0 0
    %882 = vmatprep.subr.bf16.mxu0 0
    %883 = vmatpush1.bf16.msra.mxu0 0
    %884 = vmatprep.subr.bf16.mxu0 0
    %885 = vmatpush1.bf16.msra.mxu0 0
    %886 = vmatprep.subr.bf16.mxu0 0
    %887 = vmatpush1.bf16.msra.mxu0 0
    %888 = vmatprep.subr.bf16.mxu0 0
    %889 = vmatpush1.bf16.msra.mxu0 0
    %890 = vmatprep.subr.bf16.mxu0 0
    %891 = vmatpush1.bf16.msra.mxu0 0
    %892 = vmatprep.subr.bf16.mxu0 0
    %893 = vmatpush1.bf16.msra.mxu0 %v874
    %894 = vmatprep.subr.bf16.mxu0 0
    %895 = vmatpush1.bf16.msra.mxu0 %v873
    %896 = vmatprep.subr.bf16.mxu0 0
    %897 = vmatpush2.bf16.msra.mxu0 0
    %898 = vmatprep.subr.bf16.mxu0 0
    %899 = vmatpush2.bf16.msra.mxu0 0
    %900 = vmatprep.subr.bf16.mxu0 0
    %901 = vmatpush2.bf16.msra.mxu0 0
    %902 = vmatprep.subr.bf16.mxu0 0
    %903 = vmatpush2.bf16.msra.mxu0 0
    %904 = vmatprep.subr.bf16.mxu0 0
    %905 = vmatpush2.bf16.msra.mxu0 0
    %906 = vmatprep.subr.bf16.mxu0 0
    %907 = vmatpush2.bf16.msra.mxu0 0
    %908 = vmatprep.subr.bf16.mxu0 0
    %909 = vmatpush2.bf16.msra.mxu0 0
    %910 = vmatprep.subr.bf16.mxu0 0
    %911 = vmatpush2.bf16.msra.mxu0 0
    %912 = vmatprep.mubr.bf16.mxu0 0
    %913 = vmatmul.mubr.bf16.gmra.mxu0 %v878
    %v914 = vpop.f32.mrf.mxu0
    %v915 = vadd.f32 %v860, %v914
    %v916 = vpop.f32.mrf.mxu0
    %v917 = vpop.f32.mrf.mxu0
    %v918 = vpop.f32.mrf.mxu0
    %919 = vdwg.mxu0
    %920 = vst [vmem:[#allocation11] sm:$0xff] %v915
    // Predicated region
    $region42: #{tpu_custom_call.1} parent=1 // pred_check
      _
    $region43: #{tpu_custom_call.1} parent=1 // pred_check_branch
      %922 = sbr.rel (0) target = $region45
    $region44: #{tpu_custom_call.1} parent=1 // pred_region
      %s924 = ssub.s32 128, 128
      %925 = vsyncadd [#allocation5], %s924
      %s927 = sshll.u32 [#allocation11], 4
      %s928 = int_to_ptr.vmem [resolvable:$true] %s927
      %930 = dma.vmem_to_hbm [thread:$0]  %s928, 128, %s6, [#allocation5]
    $region45: #{tpu_custom_call.1} parent=1 // pred_fallthru
      _
    // Predicated region
    $region46: #{tpu_custom_call.1} parent=1 // pred_check
      _
    $region47: #{tpu_custom_call.1} parent=1 // pred_check_branch
      %932 = sbr.rel (0) target = $region49
    $region48: #{tpu_custom_call.1} parent=1 // pred_region
      %933 = dma.done [#allocation5], 128
    $region49: #{tpu_custom_call.1} parent=1 // pred_fallthru
      _
    %934 = vsyncpa [#allocation4], 1
    %935 = vsyncpa [#allocation7], 1
    %936 = vsyncpa [#allocation10], 1
    %937 = vsyncpa [#allocation5], 1

</llo_original>
